<compile_context>
chip_gen: v7x
topology: tpu7x:2x2x1
jax: 0.10.0
libtpu: 0.0.40
codegen_flags: <defaults>
</compile_context>

<pallas_src>
import functools

import jax
import jax.numpy as jnp
from jax.experimental import pallas as pl
from jax.experimental.pallas import tpu as pltpu


def _dense_layer_kernel(x_ref, w_ref, b_ref, o_ref, xp_ref, *,
                        H, W, Cin, Cout, B, compute_dtype):
    """One grid step == B batch images.

    x_ref : (B, Cin, H*W)         raw flat images (no padding) in input dtype
    w_ref : (Cout, 9*Cpad)        im2col-packed conv weights (compute dtype)
    b_ref : (Cout, 1)             conv bias (f32)
    o_ref : (B, Cin+Cout, H*W)    [x ; relu(conv(x))] channel-concat output
    xp_ref: (Cpad, H*W + 2*W + 2) VMEM scratch: halo/channel-padded flat image
    """
    HW = H * W
    cdt = compute_dtype

    # In-kernel edge masks (replaces the former (2, HW) mask input).
    lane = jax.lax.broadcasted_iota(jnp.int32, (1, HW), 1)
    if (W & (W - 1)) == 0:                       # power-of-two W: cheap bit-and
        wpos = jnp.bitwise_and(lane, W - 1)
    else:
        wpos = lane % W
    left_ok = (wpos > 0).astype(cdt)             # zero where w == 0
    right_ok = (wpos < W - 1).astype(cdt)        # zero where w == W-1

    # Zero the halo-padded scratch once per step.  Only the interior
    # [0:Cin, W+1 : W+1+HW] is overwritten per image below, so the halo
    # columns and padded channels stay zero for every image.
    xp_ref[...] = jnp.zeros_like(xp_ref)

    cols = []
    for b in range(B):
        # Fold halo + channel padding into the kernel (no wrapper pad pass).
        xp_ref[0:Cin, W + 1:W + 1 + HW] = x_ref[b].astype(cdt)
        xp = xp_ref[...]                          # (Cpad, HW + 2W + 2)

        # im2col: 9 shifted flat windows (static lane slices) stacked along K.
        taps = []
        for dy in range(3):
            for dx in range(3):
                off = dy * W + dx
                tap = xp[:, off:off + HW]         # (Cpad, HW)
                if dx == 0:                       # reads column w-1 -> kill w==0
                    tap = tap * left_ok
                elif dx == 2:                     # reads column w+1 -> kill w==W-1
                    tap = tap * right_ok
                taps.append(tap)
        cols.append(jnp.concatenate(taps, axis=0))          # (9*Cpad, HW)

    # Batch folded into the lane axis: one lane-dense MXU matmul, f32 accum.
    col = cols[0] if B == 1 else jnp.concatenate(cols, axis=1)   # (9*Cpad, B*HW)
    acc = jnp.dot(w_ref[...], col, preferred_element_type=jnp.float32)
    y = jnp.maximum(acc + b_ref[...], 0.0)                        # (Cout, B*HW)

    for b in range(B):
        yb = y if B == 1 else y[:, b * HW:(b + 1) * HW]
        # Identity channels come straight from the aligned raw block; assemble
        # the full (Cin+Cout, HW) tile and do ONE lane-dense full-block store.
        o_ref[b] = jnp.concatenate([x_ref[b], yb.astype(o_ref.dtype)], axis=0)


def _pick_images_per_step(N, Cpad, HW, Cin, Cout):
    """Pick B (images per grid step): keep >=2 grid steps when N>=2 (v7x has
    2 TensorCores) and keep the dominant VMEM buffers well under v7x limits."""
    itemsize = 4  # size against f32 worst case
    per_img = (2 * 9 * Cpad * HW              # im2col col + tap temporaries
               + 2 * 2 * Cin * HW             # x input block, double-buffered
               + 2 * 2 * (Cin + Cout) * HW    # output block, double-buffered
               + 2 * Cout * HW) * itemsize    # accumulator / y
    budget = 8 * 1024 * 1024                  # headroom under 32 MiB scoped VMEM
    cap = max(1, budget // per_img)
    cap = min(cap, 8)                         # keep the static unroll small
    target = 1 if N < 2 else min(cap, max(1, N // 2))
    best = 1
    for d in range(1, N + 1):
        if N % d == 0 and d <= target:
            best = d
    return best


def dense_layer_forward(x_nchw, w_oihw, bias, *, compute_dtype=jnp.float32,
                        images_per_step=None):
    """Replicates DenseLayer.forward: cat([x, relu(conv3x3(x))], dim=1), NCHW."""
    N, Cin, H, W = x_nchw.shape
    Cout = w_oihw.shape[0]
    HW = H * W
    Cpad = ((Cin + 7) // 8) * 8               # round channels up to a sublane tile
    L = HW + 2 * W + 2                        # flat length incl. halo

    if images_per_step is None:
        images_per_step = _pick_images_per_step(N, Cpad, HW, Cin, Cout)
    B = images_per_step
    assert N % B == 0, (N, B)
    steps = N // B

    # Tiny parameter glue (O(KB)); activations are NOT padded/transposed here.
    x_flat = x_nchw.reshape(N, Cin, HW)       # free contiguous reshape

    # (Cout, Cin, 3, 3) -> (Cout, 3, 3, Cpad) -> (Cout, 9*Cpad), matching tap order.
    wt = jnp.transpose(w_oihw, (0, 2, 3, 1))
    wt = jnp.pad(wt, ((0, 0), (0, 0), (0, 0), (0, Cpad - Cin)))
    w_packed = wt.reshape(Cout, 9 * Cpad).astype(compute_dtype)
    b2 = bias.reshape(Cout, 1).astype(jnp.float32)

    kernel = functools.partial(_dense_layer_kernel, H=H, W=W, Cin=Cin, Cout=Cout,
                               B=B, compute_dtype=compute_dtype)

    out_flat = pl.pallas_call(
        kernel,
        out_shape=jax.ShapeDtypeStruct((N, Cin + Cout, HW), x_nchw.dtype),
        grid=(steps,),
        in_specs=[
            pl.BlockSpec((B, Cin, HW), lambda n: (n, 0, 0)),
            pl.BlockSpec((Cout, 9 * Cpad), lambda n: (0, 0)),
            pl.BlockSpec((Cout, 1), lambda n: (0, 0)),
        ],
        out_specs=pl.BlockSpec((B, Cin + Cout, HW), lambda n: (n, 0, 0)),
        scratch_shapes=[pltpu.VMEM((Cpad, L), compute_dtype)],
        compiler_params=pltpu.CompilerParams(
            dimension_semantics=("parallel",),
            vmem_limit_bytes=32 * 1024 * 1024),
    )(x_flat, w_packed, b2)

    # Free, contiguous reshape back to NCHW (N, Cin+Cout, H, W).
    return out_flat.reshape(N, Cin + Cout, H, W)


def _reference_forward(x_nchw, w_oihw, bias):
    """Plain-JAX reference (no Pallas) for correctness check."""
    y = jax.lax.conv_general_dilated(
        x_nchw, w_oihw, window_strides=(1, 1), padding=((1, 1), (1, 1)),
        dimension_numbers=("NCHW", "OIHW", "NCHW"))
    y = jnp.maximum(y + bias[None, :, None, None], 0.0)
    return jnp.concatenate([x_nchw, y], axis=1)


if __name__ == "__main__":
    # Small shapes consistent with the module: batch=2, in_ch=4, out_ch=8, 16x16.
    N, Cin, Cout, H, W = 2, 4, 8, 16, 16

    key = jax.random.PRNGKey(0)
    kx, kw, kb = jax.random.split(key, 3)
    x = jax.random.normal(kx, (N, Cin, H, W), dtype=jnp.float32)
    w = jax.random.normal(kw, (Cout, Cin, 3, 3), dtype=jnp.float32) * 0.1
    b = jax.random.normal(kb, (Cout,), dtype=jnp.float32) * 0.1

    ref = _reference_forward(x, w, b)

    # f32 path (exact module semantics).
    out = jax.block_until_ready(dense_layer_forward(x, w, b))
    assert out.shape == (N, Cin + Cout, H, W), out.shape
    assert jnp.allclose(out, ref, atol=1e-4, rtol=1e-4), "f32 mismatch vs reference"

    # bf16 operand path (v6e/v7x): bf16 taps/weights, f32 accumulation,
    # identity channels stay exact f32.  On v5e prefer compute_dtype=f32.
    out_bf16 = jax.block_until_ready(
        dense_layer_forward(x, w, b, compute_dtype=jnp.bfloat16))
    assert jnp.allclose(out_bf16, ref, atol=3e-2, rtol=3e-2), "bf16 mismatch vs reference"

    print("KERNEL_OK")
</pallas_src>

<mosaic_0001>
module attributes {stable_mosaic.version = 11 : i64} {
  func.func @_dense_layer_kernel(%arg0: i32, %arg1: memref<1x4x256xf32, #tpu.memory_space<vmem>>, %arg2: memref<8x72xf32, #tpu.memory_space<vmem>>, %arg3: memref<8x1xf32, #tpu.memory_space<vmem>>, %arg4: memref<1x12x256xf32, #tpu.memory_space<vmem>>, %arg5: memref<8x290xf32, #tpu.memory_space<vmem>>) attributes {dimension_semantics = [#tpu.dimension_semantics<parallel>], iteration_bounds = array<i64: 2>, scalar_prefetch = 0 : i64, scratch_operands = 1 : i64, tpu.core_type = #tpu.core_type<tc>, window_params = [{transform_indices = @transform_0, window_bounds = array<i64: 1, 4, 256>}, {pipeline_mode = #tpu.pipeline_mode<synchronous>, transform_indices = @transform_1, window_bounds = array<i64: 8, 72>}, {pipeline_mode = #tpu.pipeline_mode<synchronous>, transform_indices = @transform_2, window_bounds = array<i64: 8, 1>}, {transform_indices = @transform_3, window_bounds = array<i64: 1, 12, 256>}]} {
    %0 = tpu.iota {dimensions = array<i32: 1>} : vector<1x256xi32>
    %c15_i32 = arith.constant 15 : i32
    %1 = vector.broadcast %c15_i32 : i32 to vector<1x256xi32>
    %2 = arith.andi %0, %1 : vector<1x256xi32>
    %c0_i32 = arith.constant 0 : i32
    %3 = vector.broadcast %c0_i32 : i32 to vector<1x256xi32>
    %4 = arith.cmpi sgt, %2, %3 : vector<1x256xi32>
    %5 = arith.extui %4 : vector<1x256xi1> to vector<1x256xi32>
    %6 = arith.sitofp %5 : vector<1x256xi32> to vector<1x256xf32>
    %c15_i32_0 = arith.constant 15 : i32
    %7 = vector.broadcast %c15_i32_0 : i32 to vector<1x256xi32>
    %8 = arith.cmpi slt, %2, %7 : vector<1x256xi32>
    %9 = arith.extui %8 : vector<1x256xi1> to vector<1x256xi32>
    %10 = arith.sitofp %9 : vector<1x256xi32> to vector<1x256xf32>
    %cst = arith.constant 0.000000e+00 : f32
    %11 = vector.broadcast %cst : f32 to vector<8x290xf32>
    %c0 = arith.constant 0 : index
    %c0_1 = arith.constant 0 : index
    %12 = vector.load %arg5[%c0, %c0_1] : memref<8x290xf32, #tpu.memory_space<vmem>>, vector<8x290xf32>
    tpu.vector_store %arg5[%c0, %c0_1], %11 {strides = array<i32>} : memref<8x290xf32, #tpu.memory_space<vmem>>, vector<8x290xf32>,
    %c0_2 = arith.constant 0 : index
    %c0_3 = arith.constant 0 : index
    %c0_4 = arith.constant 0 : index
    %13 = vector.load %arg1[%c0_2, %c0_3, %c0_4] : memref<1x4x256xf32, #tpu.memory_space<vmem>>, vector<1x4x256xf32>
    %14 = vector.shape_cast %13 : vector<1x4x256xf32> to vector<4x256xf32>
    %c0_5 = arith.constant 0 : index
    %c17 = arith.constant 17 : index
    %15 = vector.load %arg5[%c0_5, %c17] : memref<8x290xf32, #tpu.memory_space<vmem>>, vector<4x256xf32>
    tpu.vector_store %arg5[%c0_5, %c17], %14 {strides = array<i32>} : memref<8x290xf32, #tpu.memory_space<vmem>>, vector<4x256xf32>,
    %c0_6 = arith.constant 0 : index
    %c0_7 = arith.constant 0 : index
    %16 = vector.load %arg5[%c0_6, %c0_7] : memref<8x290xf32, #tpu.memory_space<vmem>>, vector<8x290xf32>
    %17 = vector.extract_strided_slice %16 {offsets = [0, 0], sizes = [8, 256], strides = [1, 1]} : vector<8x290xf32> to vector<8x256xf32>
    %18 = vector.broadcast %6 : vector<1x256xf32> to vector<8x256xf32>
    %19 = arith.mulf %17, %18 : vector<8x256xf32>
    %20 = vector.extract_strided_slice %16 {offsets = [0, 1], sizes = [8, 256], strides = [1, 1]} : vector<8x290xf32> to vector<8x256xf32>
    %21 = vector.extract_strided_slice %16 {offsets = [0, 2], sizes = [8, 256], strides = [1, 1]} : vector<8x290xf32> to vector<8x256xf32>
    %22 = vector.broadcast %10 : vector<1x256xf32> to vector<8x256xf32>
    %23 = arith.mulf %21, %22 : vector<8x256xf32>
    %24 = vector.extract_strided_slice %16 {offsets = [0, 16], sizes = [8, 256], strides = [1, 1]} : vector<8x290xf32> to vector<8x256xf32>
    %25 = vector.broadcast %6 : vector<1x256xf32> to vector<8x256xf32>
    %26 = arith.mulf %24, %25 : vector<8x256xf32>
    %27 = vector.extract_strided_slice %16 {offsets = [0, 17], sizes = [8, 256], strides = [1, 1]} : vector<8x290xf32> to vector<8x256xf32>
    %28 = vector.extract_strided_slice %16 {offsets = [0, 18], sizes = [8, 256], strides = [1, 1]} : vector<8x290xf32> to vector<8x256xf32>
    %29 = vector.broadcast %10 : vector<1x256xf32> to vector<8x256xf32>
    %30 = arith.mulf %28, %29 : vector<8x256xf32>
    %31 = vector.extract_strided_slice %16 {offsets = [0, 32], sizes = [8, 256], strides = [1, 1]} : vector<8x290xf32> to vector<8x256xf32>
    %32 = vector.broadcast %6 : vector<1x256xf32> to vector<8x256xf32>
    %33 = arith.mulf %31, %32 : vector<8x256xf32>
    %34 = vector.extract_strided_slice %16 {offsets = [0, 33], sizes = [8, 256], strides = [1, 1]} : vector<8x290xf32> to vector<8x256xf32>
    %35 = vector.extract_strided_slice %16 {offsets = [0, 34], sizes = [8, 256], strides = [1, 1]} : vector<8x290xf32> to vector<8x256xf32>
    %36 = vector.broadcast %10 : vector<1x256xf32> to vector<8x256xf32>
    %37 = arith.mulf %35, %36 : vector<8x256xf32>
    %38 = tpu.concatenate %19, %20, %23, %26, %27, %30, %33, %34, %37 in 0 : vector<8x256xf32>, vector<8x256xf32>, vector<8x256xf32>, vector<8x256xf32>, vector<8x256xf32>, vector<8x256xf32>, vector<8x256xf32>, vector<8x256xf32>, vector<8x256xf32> -> vector<72x256xf32>
    %c0_8 = arith.constant 0 : index
    %c0_9 = arith.constant 0 : index
    %39 = vector.load %arg2[%c0_8, %c0_9] : memref<8x72xf32, #tpu.memory_space<vmem>>, vector<8x72xf32>
    %cst_10 = arith.constant dense<0.000000e+00> : vector<8x256xf32>
    %40 = tpu.matmul %39, %38, %cst_10 {dimension_numbers = #tpu.dot_dimension_numbers<[1], [0], [0], [1], [0, 0, 1, 1], [], []>} : vector<8x72xf32>, vector<72x256xf32>, vector<8x256xf32> -> vector<8x256xf32>
    %c0_11 = arith.constant 0 : index
    %c0_12 = arith.constant 0 : index
    %41 = vector.load %arg3[%c0_11, %c0_12] : memref<8x1xf32, #tpu.memory_space<vmem>>, vector<8x1xf32>
    %42 = vector.broadcast %41 : vector<8x1xf32> to vector<8x256xf32>
    %43 = arith.addf %40, %42 : vector<8x256xf32>
    %cst_13 = arith.constant 0.000000e+00 : f32
    %44 = vector.broadcast %cst_13 : f32 to vector<8x256xf32>
    %45 = arith.maximumf %43, %44 : vector<8x256xf32>
    %c0_14 = arith.constant 0 : index
    %c0_15 = arith.constant 0 : index
    %c0_16 = arith.constant 0 : index
    %46 = vector.load %arg1[%c0_14, %c0_15, %c0_16] : memref<1x4x256xf32, #tpu.memory_space<vmem>>, vector<1x4x256xf32>
    %47 = vector.shape_cast %46 : vector<1x4x256xf32> to vector<4x256xf32>
    %48 = tpu.concatenate %47, %45 in 0 : vector<4x256xf32>, vector<8x256xf32> -> vector<12x256xf32>
    %c0_17 = arith.constant 0 : index
    %c0_18 = arith.constant 0 : index
    %c0_19 = arith.constant 0 : index
    %49 = vector.load %arg4[%c0_17, %c0_18, %c0_19] : memref<1x12x256xf32, #tpu.memory_space<vmem>>, vector<1x12x256xf32>
    %50 = vector.shape_cast %49 : vector<1x12x256xf32> to vector<12x256xf32>
    %51 = vector.shape_cast %48 : vector<12x256xf32> to vector<1x12x256xf32>
    tpu.vector_store %arg4[%c0_17, %c0_18, %c0_19], %51 {strides = array<i32>} : memref<1x12x256xf32, #tpu.memory_space<vmem>>, vector<1x12x256xf32>,
    return
  }
  func.func @transform_0(%arg0: i32) -> (i32, i32, i32) {
    %c0_i32 = arith.constant 0 : i32
    %c0_i32_0 = arith.constant 0 : i32
    %c0_i32_1 = arith.constant 0 : i32
    return %arg0, %c0_i32, %c0_i32_0 : i32, i32, i32
  }
  func.func @transform_1(%arg0: i32) -> (i32, i32) {
    %c0_i32 = arith.constant 0 : i32
    %c0_i32_0 = arith.constant 0 : i32
    %c0_i32_1 = arith.constant 0 : i32
    return %c0_i32, %c0_i32_0 : i32, i32
  }
  func.func @transform_2(%arg0: i32) -> (i32, i32) {
    %c0_i32 = arith.constant 0 : i32
    %c0_i32_0 = arith.constant 0 : i32
    %c0_i32_1 = arith.constant 0 : i32
    return %c0_i32, %c0_i32_0 : i32, i32
  }
  func.func @transform_3(%arg0: i32) -> (i32, i32, i32) {
    %c0_i32 = arith.constant 0 : i32
    %c0_i32_0 = arith.constant 0 : i32
    %c0_i32_1 = arith.constant 0 : i32
    return %arg0, %c0_i32, %c0_i32_0 : i32, i32, i32
  }
}

</mosaic_0001>

<llo_original>
// kernel: tpu_custom_call.1
$region0: #{tpu_custom_call.1}
  #allocation0 [shape = 'u32[]', space=smem, size = 0x4, offset = 0x4, fixed_abs, tag = 'smem constant byte address 0x4 - core index']
  #allocation1 [shape = 'u32[144,128]{1,0:T(1,128)}', space=vmem, size = 0x12000, scoped, tag = 'internal scratch']
  #allocation2 [shape = 'f32[8,290]{1,0:T(8,128)}', space=vmem, size = 0x3000, scoped, tag = 'scratch operand']
  %s0 = inlined_call_operand.hbm [shape: f32[2,4,256], index: 0, kind: input, shape index: {}]
  %s1 = inlined_call_operand.vmem [shape: f32[8,72], index: 1, kind: input, shape index: {}]
  %s2 = inlined_call_operand.vmem [shape: f32[8,1], index: 2, kind: input, shape index: {}]
  %s3 = inlined_call_operand.vmem [shape: f32[2,12,256], index: 3, kind: output, shape index: {}]
  %s4 = sld [smem:[#allocation0]]
  $region49: #{tpu_custom_call.1} parent=0
    _
  %s6 = ssub.s32 1, %s4
  %s7 = scalar_select 0, %s6, %s4
  $region1: #{tpu_custom_call.1} parent=0
    #allocation3 [shape = 'u8[8192]{0}', space=vmem, size = 0x2000, scoped, tag = 'input window, operand 0']
    #allocation4 [shape = 's32[2]{0}', space=sflag, size = 0x8, scoped, tag = 'scoped memory for tpu_custom_call.1']
    %8 = vsyncpa [#allocation4], 0
    %s9 = scalar_lea.sflag [#allocation4], 1
    %10 = vsyncpa %s9, 0
    loop: start=0, step=1, limit=4
    $region2: #{tpu_custom_call.1} parent=1 // loop_pre_header
      _
    $region3: #{tpu_custom_call.1} parent=1 // loop_header
      %s12 = sphi 0, %s16
      %p13 = scmp.ge.s32.totalorder %s12, 4
      %s22 = sphi 0, %s24
      %s25 = sphi 0, %s22
      %s26 = sphi 0, %s25
      %s42 = sphi 0, %s26
      %s46 = sphi 0, %s46
      %s48 = sphi 0, %s46
      %s49 = sphi 0, %s48
      %s63 = sphi 0, %s49
      %s67 = sphi 0, %s67
      %s69 = sphi 0, %s67
      %s70 = sphi 0, %s69
      %s84 = sphi 0, %s70
      %s90 = sphi 0, %s92
      %s93 = sphi 0, %s90
      %s94 = sphi 0, %s93
      %s110 = sphi 0, %s94
    $region4: #{tpu_custom_call.1} parent=1 // loop_header_branch
      %15 = sbr.rel (%p13) target = $region8
    $region5: #{tpu_custom_call.1} parent=1 // loop_body
      %s17 = ssub.s32 %s12, 1
      %s18 = ssub.s32 %s12, 2
      %s19 = sadd.s32 %s12, 1
      %s20 = ssub.s32 %s12, %s19
      %p21 = scmp.eq.s32.totalorder %s20, 0
      %s23 = sadd.s32 %s22, 1
      %s24 = scalar_select %p21, %s22, %s23
      %p27 = pneg %p21
      %p28 = scmp.eq.s32.totalorder %s12, 1
      %p29 = por %p27, %p28
      %p30 = scmp.ne.s32.totalorder %s22, %s25
      %p31 = scmp.eq.s32.totalorder %s12, 0
      %p32 = por %p30, %p31
      %p33 = scmp.ne.s32.totalorder %s22, %s25
      %p34 = scmp.eq.s32.totalorder %s17, 1
      %p35 = por %p33, %p34
      %p36 = scmp.ne.s32.totalorder %s25, %s26
      %p37 = scmp.eq.s32.totalorder %s17, 0
      %p38 = por %p36, %p37
      %p39 = scmp.ne.s32.totalorder %s25, %s26
      %p40 = scmp.eq.s32.totalorder %s18, 1
      %p41 = por %p39, %p40
      %p43 = scmp.ne.s32.totalorder %s26, %s42
      %p44 = scmp.eq.s32.totalorder %s18, 0
      %p45 = por %p43, %p44
      %s47 = sadd.s32 %s46, 1
      %p50 = scmp.eq.s32.totalorder %s12, 1
      %p51 = scmp.ne.s32.totalorder %s46, %s48
      %p52 = scmp.eq.s32.totalorder %s12, 0
      %p53 = por %p51, %p52
      %p54 = scmp.ne.s32.totalorder %s46, %s48
      %p55 = scmp.eq.s32.totalorder %s17, 1
      %p56 = por %p54, %p55
      %p57 = scmp.ne.s32.totalorder %s48, %s49
      %p58 = scmp.eq.s32.totalorder %s17, 0
      %p59 = por %p57, %p58
      %p60 = scmp.ne.s32.totalorder %s48, %s49
      %p61 = scmp.eq.s32.totalorder %s18, 1
      %p62 = por %p60, %p61
      %p64 = scmp.ne.s32.totalorder %s49, %s63
      %p65 = scmp.eq.s32.totalorder %s18, 0
      %p66 = por %p64, %p65
      %s68 = sadd.s32 %s67, 1
      %p71 = scmp.eq.s32.totalorder %s12, 1
      %p72 = scmp.ne.s32.totalorder %s67, %s69
      %p73 = scmp.eq.s32.totalorder %s12, 0
      %p74 = por %p72, %p73
      %p75 = scmp.ne.s32.totalorder %s67, %s69
      %p76 = scmp.eq.s32.totalorder %s17, 1
      %p77 = por %p75, %p76
      %p78 = scmp.ne.s32.totalorder %s69, %s70
      %p79 = scmp.eq.s32.totalorder %s17, 0
      %p80 = por %p78, %p79
      %p81 = scmp.ne.s32.totalorder %s69, %s70
      %p82 = scmp.eq.s32.totalorder %s18, 1
      %p83 = por %p81, %p82
      %p85 = scmp.ne.s32.totalorder %s70, %s84
      %p86 = scmp.eq.s32.totalorder %s18, 0
      %p87 = por %p85, %p86
      %s88 = ssub.s32 %s12, %s19
      %p89 = scmp.eq.s32.totalorder %s88, 0
      %s91 = sadd.s32 %s90, 1
      %s92 = scalar_select %p89, %s90, %s91
      %p95 = pneg %p89
      %p96 = scmp.eq.s32.totalorder %s12, 1
      %p97 = por %p95, %p96
      %p98 = scmp.ne.s32.totalorder %s90, %s93
      %p99 = scmp.eq.s32.totalorder %s12, 0
      %p100 = por %p98, %p99
      %p101 = scmp.ne.s32.totalorder %s90, %s93
      %p102 = scmp.eq.s32.totalorder %s17, 1
      %p103 = por %p101, %p102
      %p104 = scmp.ne.s32.totalorder %s93, %s94
      %p105 = scmp.eq.s32.totalorder %s17, 0
      %p106 = por %p104, %p105
      %p107 = scmp.ne.s32.totalorder %s93, %s94
      %p108 = scmp.eq.s32.totalorder %s18, 1
      %p109 = por %p107, %p108
      %p111 = scmp.ne.s32.totalorder %s94, %s110
      %p112 = scmp.eq.s32.totalorder %s18, 0
      %p113 = por %p111, %p112
      %p114 = scmp.le.s32.totalorder 1, %s12
      %p115 = scmp.lt.s32.totalorder %s12, 3
      %p116 = pnand %p114, %p115
      %p117 = pneg %p116
      // Predicated region
      $region9: #{tpu_custom_call.1} parent=5 // pred_check
        _
      $region10: #{tpu_custom_call.1} parent=5 // pred_check_branch
        %119 = sbr.rel (%p116) target = $region12
      $region11: #{tpu_custom_call.1} parent=5 // pred_region
        %s120 = ssub.s32 %s12, 1
        // Predicated region
        $region13: #{tpu_custom_call.1} parent=11 // pred_check
          %p121 = pneg %p59
        $region14: #{tpu_custom_call.1} parent=11 // pred_check_branch
          %123 = sbr.rel (%p121) target = $region16
        $region15: #{tpu_custom_call.1} parent=11 // pred_region
          _
        $region16: #{tpu_custom_call.1} parent=11 // pred_fallthru
          _
        // Predicated region
        $region17: #{tpu_custom_call.1} parent=11 // pred_check
          %p124 = pneg %p80
        $region18: #{tpu_custom_call.1} parent=11 // pred_check_branch
          %126 = sbr.rel (%p124) target = $region20
        $region19: #{tpu_custom_call.1} parent=11 // pred_region
          _
        $region20: #{tpu_custom_call.1} parent=11 // pred_fallthru
          _
      $region12: #{tpu_custom_call.1} parent=5 // pred_fallthru
        _
      %p127 = scmp.lt.s32.totalorder %s12, 2
      // Predicated region
      $region21: #{tpu_custom_call.1} parent=5 // pred_check
        %p128 = pneg %p127
      $region22: #{tpu_custom_call.1} parent=5 // pred_check_branch
        %130 = sbr.rel (%p128) target = $region24
      $region23: #{tpu_custom_call.1} parent=5 // pred_region
        // Predicated region
        $region25: #{tpu_custom_call.1} parent=23 // pred_check
          %p131 = pneg %p32
        $region26: #{tpu_custom_call.1} parent=23 // pred_check_branch
          %133 = sbr.rel (%p131) target = $region28
        $region27: #{tpu_custom_call.1} parent=23 // pred_region
          %s134 = sand.u32 %s22, 1
          %s135 = scalar_lea.sflag [#allocation4], %s134
          %s136 = sand.u32 %s22, 1
          %s137 = smul.addr %s136, 8
          %s138 = scalar_lea.vmem [#allocation3], %s137
          %s140 = ssub.s32 128, 128
          %141 = vsyncadd %s135, %s140
          %s142 = smul.addr %s12, 2
          %s143 = smul.addr %s142, 64
          %s144 = scalar_lea.hbm %s0, %s143
          %s146 = sshll.u32 %s138, 4
          %s147 = int_to_ptr.vmem [resolvable:$true] %s146
          %149 = dma.hbm_to_vmem [thread:$0]  %s144, 128, %s147, %s135
        $region28: #{tpu_custom_call.1} parent=23 // pred_fallthru
          _
      $region24: #{tpu_custom_call.1} parent=5 // pred_fallthru
        _
      %p150 = scmp.le.s32.totalorder 1, %s12
      %p151 = scmp.lt.s32.totalorder %s12, 3
      %p152 = pnand %p150, %p151
      %p153 = pneg %p152
      // Predicated region
      $region29: #{tpu_custom_call.1} parent=5 // pred_check
        _
      $region30: #{tpu_custom_call.1} parent=5 // pred_check_branch
        %155 = sbr.rel (%p152) target = $region32
      $region31: #{tpu_custom_call.1} parent=5 // pred_region
        %s156 = ssub.s32 %s12, 1
        %s157 = sand.u32 %s25, 1
        %s158 = scalar_lea.sflag [#allocation4], %s157
        %s159 = sand.u32 %s25, 1
        %s160 = smul.addr %s159, 8
        %s161 = scalar_lea.vmem [#allocation3], %s160
        // Predicated region
        $region33: #{tpu_custom_call.1} parent=31 // pred_check
          %p162 = pneg %p38
        $region34: #{tpu_custom_call.1} parent=31 // pred_check_branch
          %164 = sbr.rel (%p162) target = $region36
        $region35: #{tpu_custom_call.1} parent=31 // pred_region
          %165 = dma.done %s158, 128
        $region36: #{tpu_custom_call.1} parent=31 // pred_fallthru
          _
        %s166 = sand.u32 %s25, 1
        %s167 = scalar_lea.sflag [#allocation4], %s166
        %s168 = sand.u32 %s25, 1
        %s169 = smul.addr %s168, 8
        %s170 = scalar_lea.vmem [#allocation3], %s169
        %p171 = pneg %p38
        %p172 = pneg %p35
        %p173 = pneg %p59
        %p174 = pneg %p56
        %p175 = pneg %p80
        %p176 = pneg %p77
        %p177 = pneg %p106
        %p178 = pneg %p103
        %p179 = scmp.lt.s32.totalorder %s17, 1
        %s180 = scalar_select %p179, %s17, 1
        %s181 = smul.addr %s180, 4
        %s182 = smul.addr %s181, 8
        %s183 = scalar_lea.vmem %s3, %s182
        %p184 = scmp.lt.s32.totalorder %s17, 1
        %s185 = scalar_select %p184, %s17, 1
        %s186 = smul.addr %s185, 4
        %s187 = smul.addr %s186, 8
        %s188 = scalar_lea.vmem %s3, %s187
        %v189 = vlaneseq
        %v190 = vand.u32 %v189, 127
        %v191 = vadd.s32 %v190, 128
        %v192 = vand.u32 %v190, 15
        %v193 = vand.u32 %v191, 15
        %vm194 = vcmp.gt.s32.totalorder %v192, 0
        %vm195 = vcmp.gt.s32.totalorder %v193, 0
        %v196 = vsel %vm194, 1, 0
        %v197 = vsel %vm195, 1, 0
        %v198 = vcvt.s32.f32 %v196
        %v199 = vcvt.s32.f32 %v197
        %vm200 = vcmp.lt.s32.totalorder %v192, 15
        %vm201 = vcmp.lt.s32.totalorder %v193, 15
        %v202 = vsel %vm200, 1, 0
        %v203 = vsel %vm201, 1, 0
        %v204 = vcvt.s32.f32 %v202
        %v205 = vcvt.s32.f32 %v203
        %206 = vst [vmem:[#allocation2] sm:$0xff] 0.0
        %207 = vst [vmem:[#allocation2 + $0x8] sm:$0xff] 0.0
        %vm208 = vcmask 277504
        %209 = vst.msk [vmem:[#allocation2 + $0x10] sm:$0xff] %vm208, 0.0
        %v210 = vld [vmem:[%s161] sm:$0xff]
        %v212 = vcombine.high %v210, %v210
        %213 = vrot.lane.b32.xlu0 %v210, 17
        %v214 = vpop.permute.xlu0 %213
        %215 = vrot.lane.b32.xlu0 %v212, 17
        %v216 = vpop.permute.xlu0 %215
        %vm217 = vcmask 138240
        %v218 = vsel %vm217, %v214, %v216
        %vm222 = vcmask 1043592
        %223 = vst.msk [vmem:[#allocation2] sm:$0xf] %vm222, %v214
        %224 = vst [vmem:[#allocation2 + $0x8] sm:$0xf] %v218
        %vm225 = vcmask 134144
        %226 = vst.msk [vmem:[#allocation2 + $0x10] sm:$0xf] %vm225, %v216
        %v227 = vld [vmem:[#allocation2] sm:$0xff]
        %v228 = vld [vmem:[#allocation2 + $0x8] sm:$0xff]
        %v229 = vld [vmem:[#allocation2 + $0x10] sm:$0xff]
        %v230 = vmul.f32 %v227, %v198
        %v231 = vmul.f32 %v228, %v199
        %234 = vrot.lane.b32.xlu0 %v204, 2
        %v235 = vpop.permute.xlu0 %234
        %236 = vrot.lane.b32.xlu0 %v205, 2
        %v237 = vpop.permute.xlu0 %236
        %vm238 = vcmask 15360
        %v239 = vsel %vm238, %v235, %v237
        %v243 = vmul.f32 %v227, %v235
        %v244 = vmul.f32 %v228, %v239
        %v245 = vmul.f32 %v229, %v237
        %248 = vrot.lane.b32.xlu0 %v198, 16
        %v249 = vpop.permute.xlu0 %248
        %250 = vrot.lane.b32.xlu0 %v199, 16
        %v251 = vpop.permute.xlu0 %250
        %vm252 = vcmask 130048
        %v253 = vsel %vm252, %v249, %v251
        %v257 = vmul.f32 %v227, %v249
        %v258 = vmul.f32 %v228, %v253
        %v259 = vmul.f32 %v229, %v251
        %260 = vrot.lane.b32.xlu0 %v204, 18
        %v261 = vpop.permute.xlu0 %260
        %262 = vrot.lane.b32.xlu0 %v205, 18
        %v263 = vpop.permute.xlu0 %262
        %vm264 = vcmask 146432
        %v265 = vsel %vm264, %v261, %v263
        %v269 = vmul.f32 %v227, %v261
        %v270 = vmul.f32 %v228, %v265
        %v271 = vmul.f32 %v229, %v263
        %272 = vrot.lane.b32.xlu0 %v198, 32
        %v273 = vpop.permute.xlu0 %272
        %274 = vrot.lane.b32.xlu0 %v199, 32
        %v275 = vpop.permute.xlu0 %274
        %vm276 = vcmask 261120
        %v277 = vsel %vm276, %v273, %v275
        %v281 = vmul.f32 %v227, %v273
        %v282 = vmul.f32 %v228, %v277
        %v283 = vmul.f32 %v229, %v275
        %284 = vrot.lane.b32.xlu0 %v204, 34
        %v285 = vpop.permute.xlu0 %284
        %286 = vrot.lane.b32.xlu0 %v205, 34
        %v287 = vpop.permute.xlu0 %286
        %v288 = vsel %vm208, %v285, %v287
        %v292 = vmul.f32 %v227, %v285
        %v293 = vmul.f32 %v228, %v288
        %v294 = vmul.f32 %v229, %v287
        %298 = vrot.lane.b32.xlu0 %v227, 127
        %v299 = vpop.permute.xlu0 %298
        %300 = vrot.lane.b32.xlu0 %v228, 127
        %v301 = vpop.permute.xlu0 %300
        %302 = vrot.lane.b32.xlu0 %v229, 127
        %v303 = vpop.permute.xlu0 %302
        %vm304 = vcmask 1039360
        %v305 = vsel %vm304, %v299, %v301
        %v306 = vsel %vm304, %v301, %v303
        %312 = vrot.lane.b32.xlu0 %v243, 126
        %v313 = vpop.permute.xlu0 %312
        %314 = vrot.lane.b32.xlu0 %v244, 126
        %v315 = vpop.permute.xlu0 %314
        %316 = vrot.lane.b32.xlu0 %v245, 126
        %v317 = vpop.permute.xlu0 %316
        %vm318 = vcmask 1031168
        %v319 = vsel %vm318, %v313, %v315
        %v320 = vsel %vm318, %v315, %v317
        %326 = vrot.lane.b32.xlu0 %v257, 112
        %v327 = vpop.permute.xlu0 %326
        %328 = vrot.lane.b32.xlu0 %v258, 112
        %v329 = vpop.permute.xlu0 %328
        %330 = vrot.lane.b32.xlu0 %v259, 112
        %v331 = vpop.permute.xlu0 %330
        %vm332 = vcmask 916480
        %v333 = vsel %vm332, %v327, %v329
        %v334 = vsel %vm332, %v329, %v331
        %337 = vrot.lane.b32.xlu0 %v227, 111
        %v338 = vpop.permute.xlu0 %337
        %339 = vrot.lane.b32.xlu0 %v228, 111
        %v340 = vpop.permute.xlu0 %339
        %341 = vrot.lane.b32.xlu0 %v229, 111
        %v342 = vpop.permute.xlu0 %341
        %vm343 = vcmask 908288
        %v344 = vsel %vm343, %v338, %v340
        %v345 = vsel %vm343, %v340, %v342
        %351 = vrot.lane.b32.xlu0 %v269, 110
        %v352 = vpop.permute.xlu0 %351
        %353 = vrot.lane.b32.xlu0 %v270, 110
        %v354 = vpop.permute.xlu0 %353
        %355 = vrot.lane.b32.xlu0 %v271, 110
        %v356 = vpop.permute.xlu0 %355
        %vm357 = vcmask 900096
        %v358 = vsel %vm357, %v352, %v354
        %v359 = vsel %vm357, %v354, %v356
        %365 = vrot.lane.b32.xlu0 %v281, 96
        %v366 = vpop.permute.xlu0 %365
        %367 = vrot.lane.b32.xlu0 %v282, 96
        %v368 = vpop.permute.xlu0 %367
        %369 = vrot.lane.b32.xlu0 %v283, 96
        %v370 = vpop.permute.xlu0 %369
        %vm371 = vcmask 785408
        %v372 = vsel %vm371, %v366, %v368
        %v373 = vsel %vm371, %v368, %v370
        %376 = vrot.lane.b32.xlu0 %v227, 95
        %v377 = vpop.permute.xlu0 %376
        %378 = vrot.lane.b32.xlu0 %v228, 95
        %v379 = vpop.permute.xlu0 %378
        %380 = vrot.lane.b32.xlu0 %v229, 95
        %v381 = vpop.permute.xlu0 %380
        %vm382 = vcmask 777216
        %v383 = vsel %vm382, %v377, %v379
        %v384 = vsel %vm382, %v379, %v381
        %390 = vrot.lane.b32.xlu0 %v292, 94
        %v391 = vpop.permute.xlu0 %390
        %392 = vrot.lane.b32.xlu0 %v293, 94
        %v393 = vpop.permute.xlu0 %392
        %394 = vrot.lane.b32.xlu0 %v294, 94
        %v395 = vpop.permute.xlu0 %394
        %vm396 = vcmask 769024
        %v397 = vsel %vm396, %v391, %v393
        %v398 = vsel %vm396, %v393, %v395
        %v401 = vld [vmem:[%s1] sm:$0xff]
        %v402 = vld [vmem:[%s2] sm:$0xff]
        %404 = vset.pattern.permute.xlu0 0
        %405 = vperm.xlu0 %404, %v402
        %v406 = vpop.permute.xlu0 %405
        %vm408 = vcmask 588800
        %v410 = vsel %vm408, %v401, 0
        %412 = vmatprep.subr.mxu0 %v231
        %413 = vmatpush1.msra.mxu0 %v230
        %414 = vmatprep.subr.mxu0 %v306
        %415 = vmatpush1.msra.mxu0 %v305
        %416 = vmatprep.subr.mxu0 %v320
        %417 = vmatpush1.msra.mxu0 %v319
        %418 = vmatprep.subr.mxu0 %v334
        %419 = vmatpush1.msra.mxu0 %v333
        %420 = vmatprep.subr.mxu0 %v345
        %421 = vmatpush1.msra.mxu0 %v344
        %422 = vmatprep.subr.mxu0 %v359
        %423 = vmatpush1.msra.mxu0 %v358
        %424 = vmatprep.subr.mxu0 %v373
        %425 = vmatpush1.msra.mxu0 %v372
        %426 = vmatprep.subr.mxu0 %v384
        %427 = vmatpush1.msra.mxu0 %v383
        %428 = vmatprep.subr.mxu0 %v398
        %429 = vmatpush1.msra.mxu0 %v397
        %430 = vmatprep.subr.mxu0 0.0
        %431 = vmatpush1.msra.mxu0 0.0
        %432 = vmatprep.subr.mxu0 0.0
        %433 = vmatpush1.msra.mxu0 0.0
        %434 = vmatprep.subr.mxu0 0.0
        %435 = vmatpush1.msra.mxu0 0.0
        %436 = vmatprep.subr.mxu0 0.0
        %437 = vmatpush1.msra.mxu0 0.0
        %438 = vmatprep.subr.mxu0 0.0
        %439 = vmatpush1.msra.mxu0 0.0
        %440 = vmatprep.subr.mxu0 0.0
        %441 = vmatpush1.msra.mxu0 0.0
        %442 = vmatprep.subr.mxu0 0.0
        %443 = vmatpush1.msra.mxu0 0.0
        %444 = vmatprep.subr.mxu0 0.0
        %445 = vmatpush1.msra.mxu0 0.0
        %446 = vmatprep.subr.mxu0 0.0
        %447 = vmatpush1.msra.mxu0 0.0
        %448 = vmatprep.subr.mxu0 0.0
        %449 = vmatpush1.msra.mxu0 0.0
        %450 = vmatprep.subr.mxu0 0.0
        %451 = vmatpush1.msra.mxu0 0.0
        %452 = vmatprep.subr.mxu0 0.0
        %453 = vmatpush1.msra.mxu0 0.0
        %454 = vmatprep.subr.mxu0 0.0
        %455 = vmatpush1.msra.mxu0 0.0
        %456 = vmatprep.subr.mxu0 0.0
        %457 = vmatpush1.msra.mxu0 0.0
        %458 = vmatprep.subr.mxu0 0.0
        %459 = vmatpush1.msra.mxu0 0.0
        %460 = vmatprep.subr.mxu0 0.0
        %461 = vmatpush1.msra.mxu0 0.0
        %462 = vmatprep.subr.mxu0 0.0
        %463 = vmatpush1.msra.mxu0 0.0
        %464 = vmatprep.subr.mxu0 0.0
        %465 = vmatpush1.msra.mxu0 0.0
        %466 = vmatprep.subr.mxu0 0.0
        %467 = vmatpush1.msra.mxu0 0.0
        %468 = vmatprep.subr.mxu0 0.0
        %469 = vmatpush1.msra.mxu0 0.0
        %470 = vmatprep.subr.mxu0 0.0
        %471 = vmatpush1.msra.mxu0 0.0
        %472 = vmatprep.subr.mxu0 0.0
        %473 = vmatpush1.msra.mxu0 0.0
        %474 = vmatprep.subr.mxu0 0.0
        %475 = vmatpush1.msra.mxu0 0.0
        %476 = vmatprep.mubr.f32.mxu0 0.0
        %477 = vmatmul.mubr.f32.gmra.mrb[0].mxu0 %v410
        %v478 = vpop.f32.mrb[0].mxu0
        %v479 = vadd.f32 %v406, %v478
        %v480 = vpop.f32.mrb[0].mxu0
        %v481 = vadd.f32 %v406, %v480
        %482 = vdwg.mxu0
        %v483 = vmax.f32 %v479, 0.0
        %v484 = vmax.f32 %v481, 0.0
        %v485 = vld [vmem:[%s161] sm:$0xff]
        %v487 = vcombine.high %v485, %v485
        %v491 = vrot.slane %v483, 4
        %v492 = vrot.slane %v484, 4
        %vm495 = vcmask 1043456
        %v496 = vsel %vm495, %v485, %v491
        %v497 = vsel %vm495, %v487, %v492
        %498 = vst [vmem:[%s188] sm:$0xff] %v496
        %499 = vst [vmem:[%s188 + $0x8] sm:$0xff] %v497
        %500 = vst [vmem:[%s188 + $0x10] sm:$0xf] %v491
        %501 = vst [vmem:[%s188 + $0x18] sm:$0xf] %v492
        %p502 = scmp.lt.s32.totalorder %s17, 1
        %s503 = scalar_select %p502, %s17, 1
        %s504 = smul.addr %s503, 4
        %s505 = smul.addr %s504, 8
        %s506 = scalar_lea.vmem %s3, %s505
        // Predicated region
        $region37: #{tpu_custom_call.1} parent=31 // pred_check
          %p507 = pneg %p103
        $region38: #{tpu_custom_call.1} parent=31 // pred_check_branch
          %509 = sbr.rel (%p507) target = $region40
        $region39: #{tpu_custom_call.1} parent=31 // pred_region
          _
        $region40: #{tpu_custom_call.1} parent=31 // pred_fallthru
          _
      $region32: #{tpu_custom_call.1} parent=5 // pred_fallthru
        _
      %p510 = scmp.le.s32.totalorder 2, %s12
      // Predicated region
      $region41: #{tpu_custom_call.1} parent=5 // pred_check
        %p511 = pneg %p510
      $region42: #{tpu_custom_call.1} parent=5 // pred_check_branch
        %513 = sbr.rel (%p511) target = $region44
      $region43: #{tpu_custom_call.1} parent=5 // pred_region
        %s514 = ssub.s32 %s12, 2
        // Predicated region
        $region45: #{tpu_custom_call.1} parent=43 // pred_check
          %p515 = pneg %p109
        $region46: #{tpu_custom_call.1} parent=43 // pred_check_branch
          %517 = sbr.rel (%p515) target = $region48
        $region47: #{tpu_custom_call.1} parent=43 // pred_region
          %p518 = scmp.lt.s32.totalorder %s18, 1
          %s519 = scalar_select %p518, %s18, 1
          %s520 = smul.addr %s519, 4
          %s521 = smul.addr %s520, 8
          %s522 = scalar_lea.vmem %s3, %s521
        $region48: #{tpu_custom_call.1} parent=43 // pred_fallthru
          _
      $region44: #{tpu_custom_call.1} parent=5 // pred_fallthru
        _
    $region6: #{tpu_custom_call.1} parent=1 // loop_footer
      %s16 = sadd.s32 1, %s12
    $region7: #{tpu_custom_call.1} parent=1 // loop_footer_branch
      %11 = sbr.rel target = $region3
    $region8: #{tpu_custom_call.1} parent=1 // loop_exit
      _
    %523 = vsyncpa [#allocation4], 1
    %s524 = scalar_lea.sflag [#allocation4], 1
    %525 = vsyncpa %s524, 1

</llo_original>
